<compile_context>
chip_gen: v5e
topology: v5e:2x2
jax: 0.10.0
libtpu: 0.0.40
codegen_flags: <defaults>
</compile_context>

<pallas_src>
import jax
import jax.numpy as jnp
from jax.experimental import pallas as pl
from jax.experimental.pallas import tpu as pltpu


def mlp_kernel(x_ref, w1_ref, pk_ref, sc_ref, o_ref):
    # fc1: (tile_b, D) @ (D, H) on the MXU, bf16 operands, f32 accumulation.
    h = jnp.dot(x_ref[...].astype(jnp.bfloat16), w1_ref[...],
                preferred_element_type=jnp.float32)
    h = h + pk_ref[0:1, :]                       # bias row broadcasts over tile

    # Mish with a single exp: tanh(softplus(h)) = u/(u+2), u = e^h*(e^h+2).
    # Clamping h at 20 is exact in f32 (tanh(softplus(20)) == 1).
    t = jnp.exp(jnp.minimum(h, 20.0))
    u = t * (t + 2.0)
    a = h * (u / (u + 2.0))

    # LayerNorm stats (one pass, f32) + folded affine/fc2; y never materialized.
    #   out = inv * (sum(a*g2) - mean * Sg) + c,   g2 = gamma*w2,
    #   Sg = sum(g2), c = sum(beta*w2)  (Sg, c arrive as SMEM scalars).
    g2 = pk_ref[1:2, :]
    inv_h = 1.0 / a.shape[-1]
    s1 = jnp.sum(a, axis=-1, keepdims=True)
    s2 = jnp.sum(a * a, axis=-1, keepdims=True)
    s3 = jnp.sum(a * g2, axis=-1, keepdims=True)
    mean = s1 * inv_h
    var = jnp.maximum(s2 * inv_h - mean * mean, 0.0)
    inv = jax.lax.rsqrt(var + 1e-5)
    out_col = inv * (s3 - mean * sc_ref[0]) + sc_ref[1]     # (tile_b, 1)

    # Lane-dense store: one small XLU transpose -> (1, tile_b) row.
    o_ref[...] = jnp.transpose(out_col).astype(o_ref.dtype)


def mlp_forward(x, w1, b1, gamma, beta, w2, *, tile_b=512):
    B, D = x.shape
    D2, H = w1.shape
    assert D2 == D and w2.shape == (1, H) and b1.shape == (1, H)

    # fc1 weights in bf16 (MXU rate / half the resident bytes); accum stays f32.
    w1_bf = w1.astype(jnp.bfloat16)

    # Fold LayerNorm affine + fc2 in the wrapper (tiny O(H) one-time ops).
    f32 = jnp.float32
    g2 = (gamma.astype(f32) * w2.astype(f32))                       # (1, H)
    packed = jnp.concatenate([b1.astype(f32), g2], axis=0)          # (2, H)
    scalars = jnp.stack(
        [jnp.sum(g2), jnp.sum(beta.astype(f32) * w2.astype(f32))])  # (2,) SMEM

    # Batch tiling: no host-side padding; the last block may overhang B.
    tile_b = max(8, min(tile_b, B))
    if tile_b < B:
        # Multi-tile: keep output blocks lane-aligned (and rows sublane-aligned).
        tile_b = max(128, (tile_b // 128) * 128)
    num_tiles = pl.cdiv(B, tile_b)
    Bp = num_tiles * tile_b

    cost = pl.CostEstimate(
        flops=2 * Bp * D * H + 10 * Bp * H,          # fc1 + elementwise + reduces
        transcendentals=Bp * H + Bp,                 # exp per element, rsqrt/row
        bytes_accessed=x.dtype.itemsize * B * D + 2 * D * H + 4 * (2 * H + 2 + Bp),
    )

    out_row = pl.pallas_call(
        mlp_kernel,
        out_shape=jax.ShapeDtypeStruct((1, Bp), x.dtype),
        grid=(num_tiles,),
        in_specs=[
            pl.BlockSpec((tile_b, D), lambda i: (i, 0)),        # x: streamed
            pl.BlockSpec((D, H), lambda i: (0, 0)),             # w1 (bf16): resident
            pl.BlockSpec((2, H), lambda i: (0, 0)),             # [b1; gamma*w2]
            pl.BlockSpec(memory_space=pltpu.MemorySpace.SMEM),  # [Sg, c]
        ],
        out_specs=pl.BlockSpec((1, tile_b), lambda i: (0, i)),  # lane-dense rows
        compiler_params=pltpu.CompilerParams(
            dimension_semantics=("parallel",),       # shards batch tiles on v7x
            vmem_limit_bytes=32 * 1024 * 1024,       # safe within v7x scoped VMEM
        ),
        cost_estimate=cost,
    )(x, w1_bf, packed, scalars)
    return out_row[0, :B].reshape(B, 1)


def init_params(key, input_size, hidden_size, dtype=jnp.float32):
    """Deterministic init mimicking torch.nn.Linear / LayerNorm defaults."""
    k1, k2, k3, k4 = jax.random.split(key, 4)
    bound1 = 1.0 / (input_size ** 0.5)
    # stored as (in, out) = transpose of torch's (out, in)
    w1 = jax.random.uniform(k1, (input_size, hidden_size), dtype, -bound1, bound1)
    b1 = jax.random.uniform(k2, (1, hidden_size), dtype, -bound1, bound1)
    gamma = jnp.ones((1, hidden_size), dtype)
    beta = jnp.zeros((1, hidden_size), dtype)
    bound2 = 1.0 / (hidden_size ** 0.5)
    w2 = jax.random.uniform(k3, (1, hidden_size), dtype, -bound2, bound2)
    return w1, b1, gamma, beta, w2, k4


def reference_forward(x, w1, b1, gamma, beta, w2):
    """torch MLP semantics; fc1 in bf16 (f32 accum) to match the kernel's matmul."""
    h = jnp.dot(x.astype(jnp.bfloat16), w1.astype(jnp.bfloat16),
                preferred_element_type=jnp.float32) + b1
    a = h * jnp.tanh(jax.nn.softplus(h))
    mean = jnp.mean(a, axis=-1, keepdims=True)
    var = jnp.mean((a - mean) ** 2, axis=-1, keepdims=True)
    y = (a - mean) * jax.lax.rsqrt(var + 1e-5) * gamma + beta
    return jnp.sum(y * w2, axis=-1, keepdims=True)   # fc2 (H -> 1), no bias


if __name__ == "__main__":
    # Small, lane-aligned feature dims (128 x 128 fc1); batch=300 with
    # tile_b=128 exercises a multi-tile grid (3 tiles) including the
    # overhanging partial last block and the lane-dense output path.
    batch, input_size, hidden_size = 300, 128, 128
    dtype = jnp.float32

    key = jax.random.PRNGKey(0)
    w1, b1, gamma, beta, w2, kx = init_params(key, input_size, hidden_size, dtype)
    x = jax.random.normal(kx, (batch, input_size), dtype)

    out = mlp_forward(x, w1, b1, gamma, beta, w2, tile_b=128)
    out = jax.block_until_ready(out)

    ref = reference_forward(x, w1, b1, gamma, beta, w2)
    assert out.shape == (batch, 1), out.shape
    max_err = float(jnp.max(jnp.abs(out - ref)))
    assert jnp.allclose(out, ref, atol=2e-4, rtol=2e-4), max_err

    print("KERNEL_OK")
</pallas_src>

<mosaic_0001>
module attributes {stable_mosaic.version = 11 : i64} {
  func.func @mlp_kernel(%arg0: i32, %arg1: memref<128x128xf32, #tpu.memory_space<vmem>>, %arg2: memref<128x128xbf16, #tpu.memory_space<vmem>>, %arg3: memref<2x128xf32, #tpu.memory_space<vmem>>, %arg4: memref<2xf32, #tpu.memory_space<smem>>, %arg5: memref<1x128xf32, #tpu.memory_space<vmem>>) attributes {dimension_semantics = [#tpu.dimension_semantics<parallel>], iteration_bounds = array<i64: 3>, scalar_prefetch = 0 : i64, scratch_operands = 0 : i64, tpu.core_type = #tpu.core_type<tc>, window_params = [{transform_indices = @transform_0, window_bounds = array<i64: 128, 128>}, {pipeline_mode = #tpu.pipeline_mode<synchronous>, transform_indices = @transform_1, window_bounds = array<i64: 128, 128>}, {pipeline_mode = #tpu.pipeline_mode<synchronous>, transform_indices = @transform_2, window_bounds = array<i64: 2, 128>}, {transform_indices = @transform_3, window_bounds = array<i64: 2>}, {transform_indices = @transform_4, window_bounds = array<i64: 1, 128>}]} {
    %c0 = arith.constant 0 : index
    %c0_0 = arith.constant 0 : index
    %0 = vector.load %arg1[%c0, %c0_0] : memref<128x128xf32, #tpu.memory_space<vmem>>, vector<128x128xf32>
    %1 = arith.truncf %0 : vector<128x128xf32> to vector<128x128xbf16>
    %c0_1 = arith.constant 0 : index
    %c0_2 = arith.constant 0 : index
    %2 = vector.load %arg2[%c0_1, %c0_2] : memref<128x128xbf16, #tpu.memory_space<vmem>>, vector<128x128xbf16>
    %cst = arith.constant dense<0.000000e+00> : vector<128x128xf32>
    %3 = tpu.matmul %1, %2, %cst {dimension_numbers = #tpu.dot_dimension_numbers<[1], [0], [0], [1], [0, 0, 1, 1], [], []>} : vector<128x128xbf16>, vector<128x128xbf16>, vector<128x128xf32> -> vector<128x128xf32>
    %c0_3 = arith.constant 0 : index
    %c0_4 = arith.constant 0 : index
    %4 = vector.load %arg3[%c0_3, %c0_4] : memref<2x128xf32, #tpu.memory_space<vmem>>, vector<1x128xf32>
    %5 = vector.broadcast %4 : vector<1x128xf32> to vector<128x128xf32>
    %6 = arith.addf %3, %5 : vector<128x128xf32>
    %cst_5 = arith.constant 2.000000e+01 : f32
    %7 = vector.broadcast %cst_5 : f32 to vector<128x128xf32>
    %8 = arith.minimumf %6, %7 : vector<128x128xf32>
    %9 = math.exp %8 : vector<128x128xf32>
    %cst_6 = arith.constant 2.000000e+00 : f32
    %10 = vector.broadcast %cst_6 : f32 to vector<128x128xf32>
    %11 = arith.addf %9, %10 : vector<128x128xf32>
    %12 = arith.mulf %9, %11 : vector<128x128xf32>
    %cst_7 = arith.constant 2.000000e+00 : f32
    %13 = vector.broadcast %cst_7 : f32 to vector<128x128xf32>
    %14 = arith.addf %12, %13 : vector<128x128xf32>
    %15 = arith.divf %12, %14 : vector<128x128xf32>
    %16 = arith.mulf %6, %15 : vector<128x128xf32>
    %c1 = arith.constant 1 : index
    %c0_8 = arith.constant 0 : index
    %17 = vector.load %arg3[%c1, %c0_8] : memref<2x128xf32, #tpu.memory_space<vmem>>, vector<1x128xf32>
    %cst_9 = arith.constant dense<0.000000e+00> : vector<128xf32>
    %18 = vector.multi_reduction <add>, %16, %cst_9 [1] : vector<128x128xf32> to vector<128xf32>
    %19 = vector.shape_cast %18 : vector<128xf32> to vector<128x1xf32>
    %20 = arith.mulf %16, %16 : vector<128x128xf32>
    %cst_10 = arith.constant dense<0.000000e+00> : vector<128xf32>
    %21 = vector.multi_reduction <add>, %20, %cst_10 [1] : vector<128x128xf32> to vector<128xf32>
    %22 = vector.shape_cast %21 : vector<128xf32> to vector<128x1xf32>
    %23 = vector.broadcast %17 : vector<1x128xf32> to vector<128x128xf32>
    %24 = arith.mulf %16, %23 : vector<128x128xf32>
    %cst_11 = arith.constant dense<0.000000e+00> : vector<128xf32>
    %25 = vector.multi_reduction <add>, %24, %cst_11 [1] : vector<128x128xf32> to vector<128xf32>
    %26 = vector.shape_cast %25 : vector<128xf32> to vector<128x1xf32>
    %cst_12 = arith.constant 7.812500e-03 : f32
    %27 = vector.broadcast %cst_12 : f32 to vector<128x1xf32>
    %28 = arith.mulf %19, %27 : vector<128x1xf32>
    %cst_13 = arith.constant 7.812500e-03 : f32
    %29 = vector.broadcast %cst_13 : f32 to vector<128x1xf32>
    %30 = arith.mulf %22, %29 : vector<128x1xf32>
    %31 = arith.mulf %28, %28 : vector<128x1xf32>
    %32 = arith.subf %30, %31 : vector<128x1xf32>
    %cst_14 = arith.constant 0.000000e+00 : f32
    %33 = vector.broadcast %cst_14 : f32 to vector<128x1xf32>
    %34 = arith.maximumf %32, %33 : vector<128x1xf32>
    %cst_15 = arith.constant 9.99999974E-6 : f32
    %35 = vector.broadcast %cst_15 : f32 to vector<128x1xf32>
    %36 = arith.addf %34, %35 : vector<128x1xf32>
    %37 = math.rsqrt %36 : vector<128x1xf32>
    %c0_16 = arith.constant 0 : index
    %38 = memref.load %arg4[%c0_16] : memref<2xf32, #tpu.memory_space<smem>>
    %39 = vector.broadcast %38 : f32 to vector<128x1xf32>
    %40 = arith.mulf %28, %39 : vector<128x1xf32>
    %41 = arith.subf %26, %40 : vector<128x1xf32>
    %42 = arith.mulf %37, %41 : vector<128x1xf32>
    %c1_17 = arith.constant 1 : index
    %43 = memref.load %arg4[%c1_17] : memref<2xf32, #tpu.memory_space<smem>>
    %44 = vector.broadcast %43 : f32 to vector<128x1xf32>
    %45 = arith.addf %42, %44 : vector<128x1xf32>
    %46 = tpu.transpose %45, [1, 0] : vector<128x1xf32> -> vector<1x128xf32>
    %c0_18 = arith.constant 0 : index
    %c0_19 = arith.constant 0 : index
    %47 = vector.load %arg5[%c0_18, %c0_19] : memref<1x128xf32, #tpu.memory_space<vmem>>, vector<1x128xf32>
    tpu.vector_store %arg5[%c0_18, %c0_19], %46 {strides = array<i32>} : memref<1x128xf32, #tpu.memory_space<vmem>>, vector<1x128xf32>,
    return
  }
  func.func @transform_0(%arg0: i32) -> (i32, i32) {
    %c0_i32 = arith.constant 0 : i32
    %c0_i32_0 = arith.constant 0 : i32
    return %arg0, %c0_i32 : i32, i32
  }
  func.func @transform_1(%arg0: i32) -> (i32, i32) {
    %c0_i32 = arith.constant 0 : i32
    %c0_i32_0 = arith.constant 0 : i32
    %c0_i32_1 = arith.constant 0 : i32
    return %c0_i32, %c0_i32_0 : i32, i32
  }
  func.func @transform_2(%arg0: i32) -> (i32, i32) {
    %c0_i32 = arith.constant 0 : i32
    %c0_i32_0 = arith.constant 0 : i32
    %c0_i32_1 = arith.constant 0 : i32
    return %c0_i32, %c0_i32_0 : i32, i32
  }
  func.func @transform_3(%arg0: i32) -> i32 {
    %c0_i32 = arith.constant 0 : i32
    %c0_i32_0 = arith.constant 0 : i32
    return %c0_i32 : i32
  }
  func.func @transform_4(%arg0: i32) -> (i32, i32) {
    %c0_i32 = arith.constant 0 : i32
    %c0_i32_0 = arith.constant 0 : i32
    return %c0_i32, %arg0 : i32, i32
  }
}

</mosaic_0001>

<llo_original>
// kernel: tpu_custom_call.1
$region0: #{tpu_custom_call.1}
  #allocation0 [shape = 'u32[]', space=smem, size = 0x4, offset = 0x4, fixed_abs, tag = 'smem constant byte address 0x4 - core index']
  #allocation1 [shape = 'u32[72,128]{1,0:T(1,128)}', space=vmem, size = 0x9000, scoped, tag = 'internal scratch']
  %s0 = inlined_call_operand.hbm [shape: f32[300,128], index: 0, kind: input, shape index: {}]
  %s1 = inlined_call_operand.hbm [shape: bf16[128,128], index: 1, kind: input, shape index: {}]
  %s2 = inlined_call_operand.hbm [shape: f32[2,128], index: 2, kind: input, shape index: {}]
  %s3 = inlined_call_operand.vmem [shape: f32[2], index: 3, kind: input, shape index: {}]
  %s4 = inlined_call_operand.hbm [shape: f32[1,384], index: 4, kind: output, shape index: {}]
  %s5 = sld [smem:[#allocation0]]
  $region65: #{tpu_custom_call.1} parent=0
    _
  %s7 = ssub.s32 1, %s5
  %s8 = scalar_select 0, %s7, %s5
  $region1: #{tpu_custom_call.1} parent=0
    #allocation2 [shape = 'u8[131072]{0}', space=vmem, size = 0x20000, scoped, tag = 'input window, operand 0']
    #allocation3 [shape = 's32[2]{0}', space=sflag, size = 0x8, scoped, tag = 'scoped memory for tpu_custom_call.1']
    #allocation4 [shape = 's32[2]{0}', space=sflag, size = 0x8, scoped, tag = 'scoped memory for tpu_custom_call.1']
    #allocation5 [shape = 's32[2]{0}', space=sflag, size = 0x8, scoped, tag = 'scoped memory for tpu_custom_call.1']
    #allocation6 [shape = 'u8[32768]{0}', space=vmem, size = 0x8000, scoped, tag = 'input window, operand 1, single buffered']
    #allocation7 [shape = 's32[1]{0}', space=sflag, size = 0x4, scoped, tag = 'scoped memory for tpu_custom_call.1']
    #allocation8 [shape = 'u8[1024]{0}', space=vmem, size = 0x400, scoped, tag = 'input window, operand 2, single buffered']
    #allocation9 [shape = 'u8[512]{0}', space=smem, size = 0x200, scoped, tag = 'input window, operand 3, single buffered']
    #allocation10 [shape = 'u8[1024]{0}', space=vmem, size = 0x400, scoped, tag = 'output window, operand 0']
    %9 = vsyncpa [#allocation3], 0
    %s10 = scalar_lea.sflag [#allocation3], 1
    %11 = vsyncpa %s10, 0
    %12 = vsyncpa [#allocation7], 0
    %13 = vsyncpa [#allocation5], 0
    %14 = vsyncpa [#allocation4], 0
    %s15 = scalar_lea.sflag [#allocation4], 1
    %16 = vsyncpa %s15, 0
    loop: start=0, step=1, limit=5
    $region2: #{tpu_custom_call.1} parent=1 // loop_pre_header
      _
    $region3: #{tpu_custom_call.1} parent=1 // loop_header
      %s18 = sphi 0, %s22
      %p19 = scmp.ge.s32.totalorder %s18, 5
      %s28 = sphi 0, %s30
      %s31 = sphi 0, %s28
      %s32 = sphi 0, %s31
      %s48 = sphi 0, %s32
      %s52 = sphi 0, %s52
      %s54 = sphi 0, %s52
      %s55 = sphi 0, %s54
      %s69 = sphi 0, %s55
      %s73 = sphi 0, %s73
      %s75 = sphi 0, %s73
      %s76 = sphi 0, %s75
      %s90 = sphi 0, %s76
      %s94 = sphi 0, %s94
      %s96 = sphi 0, %s94
      %s97 = sphi 0, %s96
      %s111 = sphi 0, %s97
      %s117 = sphi 0, %s119
      %s120 = sphi 0, %s117
      %s121 = sphi 0, %s120
      %s137 = sphi 0, %s121
    $region4: #{tpu_custom_call.1} parent=1 // loop_header_branch
      %21 = sbr.rel (%p19) target = $region8
    $region5: #{tpu_custom_call.1} parent=1 // loop_body
      %s23 = ssub.s32 %s18, 1
      %s24 = ssub.s32 %s18, 2
      %s25 = sadd.s32 %s18, 1
      %s26 = ssub.s32 %s18, %s25
      %p27 = scmp.eq.s32.totalorder %s26, 0
      %s29 = sadd.s32 %s28, 1
      %s30 = scalar_select %p27, %s28, %s29
      %p33 = pneg %p27
      %p34 = scmp.eq.s32.totalorder %s18, 2
      %p35 = por %p33, %p34
      %p36 = scmp.ne.s32.totalorder %s28, %s31
      %p37 = scmp.eq.s32.totalorder %s18, 0
      %p38 = por %p36, %p37
      %p39 = scmp.ne.s32.totalorder %s28, %s31
      %p40 = scmp.eq.s32.totalorder %s23, 2
      %p41 = por %p39, %p40
      %p42 = scmp.ne.s32.totalorder %s31, %s32
      %p43 = scmp.eq.s32.totalorder %s23, 0
      %p44 = por %p42, %p43
      %p45 = scmp.ne.s32.totalorder %s31, %s32
      %p46 = scmp.eq.s32.totalorder %s24, 2
      %p47 = por %p45, %p46
      %p49 = scmp.ne.s32.totalorder %s32, %s48
      %p50 = scmp.eq.s32.totalorder %s24, 0
      %p51 = por %p49, %p50
      %s53 = sadd.s32 %s52, 1
      %p56 = scmp.eq.s32.totalorder %s18, 2
      %p57 = scmp.ne.s32.totalorder %s52, %s54
      %p58 = scmp.eq.s32.totalorder %s18, 0
      %p59 = por %p57, %p58
      %p60 = scmp.ne.s32.totalorder %s52, %s54
      %p61 = scmp.eq.s32.totalorder %s23, 2
      %p62 = por %p60, %p61
      %p63 = scmp.ne.s32.totalorder %s54, %s55
      %p64 = scmp.eq.s32.totalorder %s23, 0
      %p65 = por %p63, %p64
      %p66 = scmp.ne.s32.totalorder %s54, %s55
      %p67 = scmp.eq.s32.totalorder %s24, 2
      %p68 = por %p66, %p67
      %p70 = scmp.ne.s32.totalorder %s55, %s69
      %p71 = scmp.eq.s32.totalorder %s24, 0
      %p72 = por %p70, %p71
      %s74 = sadd.s32 %s73, 1
      %p77 = scmp.eq.s32.totalorder %s18, 2
      %p78 = scmp.ne.s32.totalorder %s73, %s75
      %p79 = scmp.eq.s32.totalorder %s18, 0
      %p80 = por %p78, %p79
      %p81 = scmp.ne.s32.totalorder %s73, %s75
      %p82 = scmp.eq.s32.totalorder %s23, 2
      %p83 = por %p81, %p82
      %p84 = scmp.ne.s32.totalorder %s75, %s76
      %p85 = scmp.eq.s32.totalorder %s23, 0
      %p86 = por %p84, %p85
      %p87 = scmp.ne.s32.totalorder %s75, %s76
      %p88 = scmp.eq.s32.totalorder %s24, 2
      %p89 = por %p87, %p88
      %p91 = scmp.ne.s32.totalorder %s76, %s90
      %p92 = scmp.eq.s32.totalorder %s24, 0
      %p93 = por %p91, %p92
      %s95 = sadd.s32 %s94, 1
      %p98 = scmp.eq.s32.totalorder %s18, 2
      %p99 = scmp.ne.s32.totalorder %s94, %s96
      %p100 = scmp.eq.s32.totalorder %s18, 0
      %p101 = por %p99, %p100
      %p102 = scmp.ne.s32.totalorder %s94, %s96
      %p103 = scmp.eq.s32.totalorder %s23, 2
      %p104 = por %p102, %p103
      %p105 = scmp.ne.s32.totalorder %s96, %s97
      %p106 = scmp.eq.s32.totalorder %s23, 0
      %p107 = por %p105, %p106
      %p108 = scmp.ne.s32.totalorder %s96, %s97
      %p109 = scmp.eq.s32.totalorder %s24, 2
      %p110 = por %p108, %p109
      %p112 = scmp.ne.s32.totalorder %s97, %s111
      %p113 = scmp.eq.s32.totalorder %s24, 0
      %p114 = por %p112, %p113
      %s115 = ssub.s32 %s18, %s25
      %p116 = scmp.eq.s32.totalorder %s115, 0
      %s118 = sadd.s32 %s117, 1
      %s119 = scalar_select %p116, %s117, %s118
      %p122 = pneg %p116
      %p123 = scmp.eq.s32.totalorder %s18, 2
      %p124 = por %p122, %p123
      %p125 = scmp.ne.s32.totalorder %s117, %s120
      %p126 = scmp.eq.s32.totalorder %s18, 0
      %p127 = por %p125, %p126
      %p128 = scmp.ne.s32.totalorder %s117, %s120
      %p129 = scmp.eq.s32.totalorder %s23, 2
      %p130 = por %p128, %p129
      %p131 = scmp.ne.s32.totalorder %s120, %s121
      %p132 = scmp.eq.s32.totalorder %s23, 0
      %p133 = por %p131, %p132
      %p134 = scmp.ne.s32.totalorder %s120, %s121
      %p135 = scmp.eq.s32.totalorder %s24, 2
      %p136 = por %p134, %p135
      %p138 = scmp.ne.s32.totalorder %s121, %s137
      %p139 = scmp.eq.s32.totalorder %s24, 0
      %p140 = por %p138, %p139
      %p141 = scmp.le.s32.totalorder 1, %s18
      %p142 = scmp.lt.s32.totalorder %s18, 4
      %p143 = pnand %p141, %p142
      %p144 = pneg %p143
      // Predicated region
      $region9: #{tpu_custom_call.1} parent=5 // pred_check
        _
      $region10: #{tpu_custom_call.1} parent=5 // pred_check_branch
        %146 = sbr.rel (%p143) target = $region12
      $region11: #{tpu_custom_call.1} parent=5 // pred_region
        %s147 = ssub.s32 %s18, 1
        // Predicated region
        $region13: #{tpu_custom_call.1} parent=11 // pred_check
          %p148 = pneg %p65
        $region14: #{tpu_custom_call.1} parent=11 // pred_check_branch
          %150 = sbr.rel (%p148) target = $region16
        $region15: #{tpu_custom_call.1} parent=11 // pred_region
          %152 = vsyncadd [#allocation7], 0
          %s153 = sshll.u32 %s1, 4
          %s154 = int_to_ptr.hbm [resolvable:$true] %s153
          %s155 = sshll.u32 [#allocation6], 4
          %s156 = int_to_ptr.vmem [resolvable:$true] %s155
          %161 = dma.hbm_to_vmem [thread:$0]  %s154, 1024, %s156, [#allocation7], 64, 64, 4
        $region16: #{tpu_custom_call.1} parent=11 // pred_fallthru
          _
        // Predicated region
        $region17: #{tpu_custom_call.1} parent=11 // pred_check
          %p162 = pneg %p86
        $region18: #{tpu_custom_call.1} parent=11 // pred_check_branch
          %164 = sbr.rel (%p162) target = $region20
        $region19: #{tpu_custom_call.1} parent=11 // pred_region
          %166 = vsyncadd [#allocation7], 0
          %s168 = sshll.u32 %s2, 4
          %s169 = int_to_ptr.hbm [resolvable:$true] %s168
          %s170 = sshll.u32 [#allocation8], 4
          %s171 = int_to_ptr.vmem [resolvable:$true] %s170
          %173 = dma.hbm_to_vmem [thread:$0]  %s169, 32, %s171, [#allocation7]
        $region20: #{tpu_custom_call.1} parent=11 // pred_fallthru
          _
        // Predicated region
        $region21: #{tpu_custom_call.1} parent=11 // pred_check
          %p174 = pneg %p107
        $region22: #{tpu_custom_call.1} parent=11 // pred_check_branch
          %176 = sbr.rel (%p174) target = $region24
        $region23: #{tpu_custom_call.1} parent=11 // pred_region
          %178 = vsyncadd [#allocation5], 0
          %s180 = sshll.u32 %s3, 4
          %s181 = int_to_ptr.vmem [resolvable:$true] %s180
          %183 = dma.vmem_to_smem %s181, 16, [#allocation9], [#allocation5]
        $region24: #{tpu_custom_call.1} parent=11 // pred_fallthru
          _
      $region12: #{tpu_custom_call.1} parent=5 // pred_fallthru
        _
      %p184 = scmp.lt.s32.totalorder %s18, 3
      // Predicated region
      $region25: #{tpu_custom_call.1} parent=5 // pred_check
        %p185 = pneg %p184
      $region26: #{tpu_custom_call.1} parent=5 // pred_check_branch
        %187 = sbr.rel (%p185) target = $region28
      $region27: #{tpu_custom_call.1} parent=5 // pred_region
        // Predicated region
        $region29: #{tpu_custom_call.1} parent=27 // pred_check
          %p188 = pneg %p38
        $region30: #{tpu_custom_call.1} parent=27 // pred_check_branch
          %190 = sbr.rel (%p188) target = $region32
        $region31: #{tpu_custom_call.1} parent=27 // pred_region
          %s191 = sand.u32 %s28, 1
          %s192 = scalar_lea.sflag [#allocation3], %s191
          %s193 = sand.u32 %s28, 1
          %s194 = smul.addr %s193, 128
          %s195 = scalar_lea.vmem [#allocation2], %s194
          %s196 = smul.u32 16, %s18
          %s197 = ssub.s32 38, %s196
          %p198 = scmp.lt.s32.totalorder %s197, 16
          %s199 = scalar_select %p198, %s197, 16
          %s200 = smul.u32 8, %s199
          %s201 = ssub.s32 128, %s200
          %s202 = sshll.u32 %s201, 4
          %203 = vsyncadd %s192, %s202
          %p204 = scmp.ne.s32.totalorder 0, %s200
          %s205 = smul.addr %s196, 8
          %s206 = scalar_lea.hbm %s0, %s205
          %s207 = smul.u32 8, %s199
          %s208 = sshll.u32 %s206, 4
          %s209 = int_to_ptr.hbm [resolvable:$true] %s208
          %s210 = sshll.u32 %s195, 4
          %s211 = int_to_ptr.vmem [resolvable:$true] %s210
          %s212 = sshll.u32 %s207, 4
          %216 = dma.hbm_to_vmem [thread:$0]  (%p204), %s209, %s212, %s211, %s192, 128, 128, 8
        $region32: #{tpu_custom_call.1} parent=27 // pred_fallthru
          _
      $region28: #{tpu_custom_call.1} parent=5 // pred_fallthru
        _
      %p217 = scmp.le.s32.totalorder 1, %s18
      %p218 = scmp.lt.s32.totalorder %s18, 4
      %p219 = pnand %p217, %p218
      %p220 = pneg %p219
      // Predicated region
      $region33: #{tpu_custom_call.1} parent=5 // pred_check
        _
      $region34: #{tpu_custom_call.1} parent=5 // pred_check_branch
        %222 = sbr.rel (%p219) target = $region36
      $region35: #{tpu_custom_call.1} parent=5 // pred_region
        %s223 = ssub.s32 %s18, 1
        %s224 = sand.u32 %s31, 1
        %s225 = scalar_lea.sflag [#allocation3], %s224
        %s226 = sand.u32 %s31, 1
        %s227 = smul.addr %s226, 128
        %s228 = scalar_lea.vmem [#allocation2], %s227
        // Predicated region
        $region37: #{tpu_custom_call.1} parent=35 // pred_check
          %p229 = pneg %p44
        $region38: #{tpu_custom_call.1} parent=35 // pred_check_branch
          %231 = sbr.rel (%p229) target = $region40
        $region39: #{tpu_custom_call.1} parent=35 // pred_region
          %233 = dma.done %s225, 2048
        $region40: #{tpu_custom_call.1} parent=35 // pred_fallthru
          _
        // Predicated region
        $region41: #{tpu_custom_call.1} parent=35 // pred_check
          %p234 = pneg %p65
        $region42: #{tpu_custom_call.1} parent=35 // pred_check_branch
          %236 = sbr.rel (%p234) target = $region44
        $region43: #{tpu_custom_call.1} parent=35 // pred_region
          %238 = dma.done [#allocation7], 1024
        $region44: #{tpu_custom_call.1} parent=35 // pred_fallthru
          _
        // Predicated region
        $region45: #{tpu_custom_call.1} parent=35 // pred_check
          %p239 = pneg %p86
        $region46: #{tpu_custom_call.1} parent=35 // pred_check_branch
          %241 = sbr.rel (%p239) target = $region48
        $region47: #{tpu_custom_call.1} parent=35 // pred_region
          %243 = dma.done [#allocation7], 32
        $region48: #{tpu_custom_call.1} parent=35 // pred_fallthru
          _
        // Predicated region
        $region49: #{tpu_custom_call.1} parent=35 // pred_check
          %p244 = pneg %p107
        $region50: #{tpu_custom_call.1} parent=35 // pred_check_branch
          %246 = sbr.rel (%p244) target = $region52
        $region51: #{tpu_custom_call.1} parent=35 // pred_region
          %248 = dma.done [#allocation5], 16
        $region52: #{tpu_custom_call.1} parent=35 // pred_fallthru
          _
        %249 = sfence
        %s250 = sand.u32 %s31, 1
        %s251 = scalar_lea.sflag [#allocation3], %s250
        %s252 = sand.u32 %s31, 1
        %s253 = smul.addr %s252, 128
        %s254 = scalar_lea.vmem [#allocation2], %s253
        %p255 = pneg %p44
        %p256 = pneg %p41
        %p257 = pneg %p65
        %p258 = pneg %p62
        %p259 = pneg %p86
        %p260 = pneg %p83
        %p261 = pneg %p107
        %p262 = pneg %p104
        %p263 = pneg %p133
        %p264 = pneg %p130
        %s265 = sand.u32 %s120, 1
        %s266 = scalar_lea.sflag [#allocation4], %s265
        %s267 = sand.u32 %s120, 1
        %s268 = scalar_lea.vmem [#allocation10], %s267
        %s269 = smul.u32 16, %s23
        %s270 = ssub.s32 38, %s269
        %p271 = scmp.lt.s32.totalorder %s270, 16
        %s272 = scalar_select %p271, %s270, 16
        %s273 = smul.u32 8, %s272
        %v274 = vld [vmem:[%s228] sm:$0xff]
        %v275 = vld [vmem:[%s228 + $0x8] sm:$0xff]
        %v276 = vld [vmem:[%s228 + $0x10] sm:$0xff]
        %v277 = vld [vmem:[%s228 + $0x18] sm:$0xff]
        %v278 = vld [vmem:[%s228 + $0x20] sm:$0xff]
        %v279 = vld [vmem:[%s228 + $0x28] sm:$0xff]
        %v280 = vld [vmem:[%s228 + $0x30] sm:$0xff]
        %v281 = vld [vmem:[%s228 + $0x38] sm:$0xff]
        %v282 = vld [vmem:[%s228 + $0x40] sm:$0xff]
        %v283 = vld [vmem:[%s228 + $0x48] sm:$0xff]
        %v284 = vld [vmem:[%s228 + $0x50] sm:$0xff]
        %v285 = vld [vmem:[%s228 + $0x58] sm:$0xff]
        %v286 = vld [vmem:[%s228 + $0x60] sm:$0xff]
        %v287 = vld [vmem:[%s228 + $0x68] sm:$0xff]
        %v288 = vld [vmem:[%s228 + $0x70] sm:$0xff]
        %v289 = vld [vmem:[%s228 + $0x78] sm:$0xff]
        %v290 = vpack.c.bf16 %v275, %v274
        %v291 = vpack.c.bf16 %v277, %v276
        %v292 = vpack.c.bf16 %v279, %v278
        %v293 = vpack.c.bf16 %v281, %v280
        %v294 = vpack.c.bf16 %v283, %v282
        %v295 = vpack.c.bf16 %v285, %v284
        %v296 = vpack.c.bf16 %v287, %v286
        %v297 = vpack.c.bf16 %v289, %v288
        %v298 = vld [vmem:[#allocation6] sm:$0xf]
        %v299 = vld [vmem:[#allocation6 + $0x4] sm:$0xf]
        %v300 = vld [vmem:[#allocation6 + $0x8] sm:$0xf]
        %v301 = vld [vmem:[#allocation6 + $0xc] sm:$0xf]
        %v302 = vld [vmem:[#allocation6 + $0x10] sm:$0xf]
        %v303 = vld [vmem:[#allocation6 + $0x14] sm:$0xf]
        %v304 = vld [vmem:[#allocation6 + $0x18] sm:$0xf]
        %v305 = vld [vmem:[#allocation6 + $0x1c] sm:$0xf]
        %v306 = vld [vmem:[#allocation6 + $0x20] sm:$0xf]
        %v307 = vld [vmem:[#allocation6 + $0x24] sm:$0xf]
        %v308 = vld [vmem:[#allocation6 + $0x28] sm:$0xf]
        %v309 = vld [vmem:[#allocation6 + $0x2c] sm:$0xf]
        %v310 = vld [vmem:[#allocation6 + $0x30] sm:$0xf]
        %v311 = vld [vmem:[#allocation6 + $0x34] sm:$0xf]
        %v312 = vld [vmem:[#allocation6 + $0x38] sm:$0xf]
        %v313 = vld [vmem:[#allocation6 + $0x3c] sm:$0xf]
        %v314 = vld [vmem:[#allocation8] sm:$0x1]
        %v315 = vperm.slane %v314, 0
        %v332 = vunpack.c.l.b16 %v298
        %v333 = vunpack.c.l.b16 %v299
        %v334 = vunpack.c.l.b16 %v300
        %v335 = vunpack.c.l.b16 %v301
        %v336 = vunpack.c.l.b16 %v302
        %v337 = vunpack.c.l.b16 %v303
        %v338 = vunpack.c.l.b16 %v304
        %v339 = vunpack.c.l.b16 %v305
        %v340 = vunpack.c.l.b16 %v306
        %v341 = vunpack.c.l.b16 %v307
        %v342 = vunpack.c.l.b16 %v308
        %v343 = vunpack.c.l.b16 %v309
        %v344 = vunpack.c.l.b16 %v310
        %v345 = vunpack.c.l.b16 %v311
        %v346 = vunpack.c.l.b16 %v312
        %v347 = vunpack.c.l.b16 %v313
        %v348 = vpack.c.b16 %v333, %v332
        %v349 = vpack.c.b16 %v335, %v334
        %v350 = vpack.c.b16 %v337, %v336
        %v351 = vpack.c.b16 %v339, %v338
        %v352 = vpack.c.b16 %v341, %v340
        %v353 = vpack.c.b16 %v343, %v342
        %v354 = vpack.c.b16 %v345, %v344
        %v355 = vpack.c.b16 %v347, %v346
        %364 = vmatpush.bf16.msra.mxu0 %v355
        %365 = vmatpush.bf16.msra.mxu0 %v354
        %366 = vmatpush.bf16.msra.mxu0 %v353
        %367 = vmatpush.bf16.msra.mxu0 %v352
        %368 = vmatpush.bf16.msra.mxu0 %v351
        %369 = vmatpush.bf16.msra.mxu0 %v350
        %370 = vmatpush.bf16.msra.mxu0 %v349
        %371 = vmatpush.bf16.msra.mxu0 %v348
        %372 = vmatmul.bf16.gmra.mxu0 %v290
        %v373 = vpop.f32.mrf.mxu0
        %v374 = vadd.f32 %v315, %v373
        %v375 = vpop.f32.mrf.mxu0
        %v376 = vadd.f32 %v315, %v375
        %377 = vmatmul.bf16.gmra.mxu0 %v291
        %v378 = vpop.f32.mrf.mxu0
        %v379 = vadd.f32 %v315, %v378
        %v380 = vpop.f32.mrf.mxu0
        %v381 = vadd.f32 %v315, %v380
        %382 = vmatmul.bf16.gmra.mxu0 %v292
        %v383 = vpop.f32.mrf.mxu0
        %v384 = vadd.f32 %v315, %v383
        %v385 = vpop.f32.mrf.mxu0
        %v386 = vadd.f32 %v315, %v385
        %387 = vmatmul.bf16.gmra.mxu0 %v293
        %v388 = vpop.f32.mrf.mxu0
        %v389 = vadd.f32 %v315, %v388
        %v390 = vpop.f32.mrf.mxu0
        %v391 = vadd.f32 %v315, %v390
        %392 = vmatmul.bf16.gmra.mxu0 %v294
        %v393 = vpop.f32.mrf.mxu0
        %v394 = vadd.f32 %v315, %v393
        %v395 = vpop.f32.mrf.mxu0
        %v396 = vadd.f32 %v315, %v395
        %397 = vmatmul.bf16.gmra.mxu0 %v295
        %v398 = vpop.f32.mrf.mxu0
        %v399 = vadd.f32 %v315, %v398
        %v400 = vpop.f32.mrf.mxu0
        %v401 = vadd.f32 %v315, %v400
        %402 = vmatmul.bf16.gmra.mxu0 %v296
        %v403 = vpop.f32.mrf.mxu0
        %v404 = vadd.f32 %v315, %v403
        %v405 = vpop.f32.mrf.mxu0
        %v406 = vadd.f32 %v315, %v405
        %407 = vmatmul.bf16.gmra.mxu0 %v297
        %v408 = vpop.f32.mrf.mxu0
        %v409 = vadd.f32 %v315, %v408
        %v410 = vpop.f32.mrf.mxu0
        %v411 = vadd.f32 %v315, %v410
        %412 = vdwg.mxu0
        %v413 = vmin.f32 %v374, 20.0
        %v414 = vmin.f32 %v376, 20.0
        %v415 = vmin.f32 %v379, 20.0
        %v416 = vmin.f32 %v381, 20.0
        %v417 = vmin.f32 %v384, 20.0
        %v418 = vmin.f32 %v386, 20.0
        %v419 = vmin.f32 %v389, 20.0
        %v420 = vmin.f32 %v391, 20.0
        %v421 = vmin.f32 %v394, 20.0
        %v422 = vmin.f32 %v396, 20.0
        %v423 = vmin.f32 %v399, 20.0
        %v424 = vmin.f32 %v401, 20.0
        %v425 = vmin.f32 %v404, 20.0
        %v426 = vmin.f32 %v406, 20.0
        %v427 = vmin.f32 %v409, 20.0
        %v428 = vmin.f32 %v411, 20.0
        %v429 = vmul.f32 %v413, 1.442695
        %v430 = vpow.pop %v429
        %v431 = vmul.f32 %v414, 1.442695
        %v432 = vpow.pop %v431
        %v433 = vmul.f32 %v415, 1.442695
        %v434 = vpow.pop %v433
        %v435 = vmul.f32 %v416, 1.442695
        %v436 = vpow.pop %v435
        %v437 = vmul.f32 %v417, 1.442695
        %v438 = vpow.pop %v437
        %v439 = vmul.f32 %v418, 1.442695
        %v440 = vpow.pop %v439
        %v441 = vmul.f32 %v419, 1.442695
        %v442 = vpow.pop %v441
        %v443 = vmul.f32 %v420, 1.442695
        %v444 = vpow.pop %v443
        %v445 = vmul.f32 %v421, 1.442695
        %v446 = vpow.pop %v445
        %v447 = vmul.f32 %v422, 1.442695
        %v448 = vpow.pop %v447
        %v449 = vmul.f32 %v423, 1.442695
        %v450 = vpow.pop %v449
        %v451 = vmul.f32 %v424, 1.442695
        %v452 = vpow.pop %v451
        %v453 = vmul.f32 %v425, 1.442695
        %v454 = vpow.pop %v453
        %v455 = vmul.f32 %v426, 1.442695
        %v456 = vpow.pop %v455
        %v457 = vmul.f32 %v427, 1.442695
        %v458 = vpow.pop %v457
        %v459 = vmul.f32 %v428, 1.442695
        %v460 = vpow.pop %v459
        %v461 = vadd.f32 %v430, 2.0
        %v462 = vadd.f32 %v432, 2.0
        %v463 = vadd.f32 %v434, 2.0
        %v464 = vadd.f32 %v436, 2.0
        %v465 = vadd.f32 %v438, 2.0
        %v466 = vadd.f32 %v440, 2.0
        %v467 = vadd.f32 %v442, 2.0
        %v468 = vadd.f32 %v444, 2.0
        %v469 = vadd.f32 %v446, 2.0
        %v470 = vadd.f32 %v448, 2.0
        %v471 = vadd.f32 %v450, 2.0
        %v472 = vadd.f32 %v452, 2.0
        %v473 = vadd.f32 %v454, 2.0
        %v474 = vadd.f32 %v456, 2.0
        %v475 = vadd.f32 %v458, 2.0
        %v476 = vadd.f32 %v460, 2.0
        %v477 = vmul.f32 %v430, %v461
        %v478 = vmul.f32 %v432, %v462
        %v479 = vmul.f32 %v434, %v463
        %v480 = vmul.f32 %v436, %v464
        %v481 = vmul.f32 %v438, %v465
        %v482 = vmul.f32 %v440, %v466
        %v483 = vmul.f32 %v442, %v467
        %v484 = vmul.f32 %v444, %v468
        %v485 = vmul.f32 %v446, %v469
        %v486 = vmul.f32 %v448, %v470
        %v487 = vmul.f32 %v450, %v471
        %v488 = vmul.f32 %v452, %v472
        %v489 = vmul.f32 %v454, %v473
        %v490 = vmul.f32 %v456, %v474
        %v491 = vmul.f32 %v458, %v475
        %v492 = vmul.f32 %v460, %v476
        %v493 = vadd.f32 %v477, 2.0
        %v494 = vadd.f32 %v478, 2.0
        %v495 = vadd.f32 %v479, 2.0
        %v496 = vadd.f32 %v480, 2.0
        %v497 = vadd.f32 %v481, 2.0
        %v498 = vadd.f32 %v482, 2.0
        %v499 = vadd.f32 %v483, 2.0
        %v500 = vadd.f32 %v484, 2.0
        %v501 = vadd.f32 %v485, 2.0
        %v502 = vadd.f32 %v486, 2.0
        %v503 = vadd.f32 %v487, 2.0
        %v504 = vadd.f32 %v488, 2.0
        %v505 = vadd.f32 %v489, 2.0
        %v506 = vadd.f32 %v490, 2.0
        %v507 = vadd.f32 %v491, 2.0
        %v508 = vadd.f32 %v492, 2.0
        %v509 = vrcp.pop %v493
        %v510 = vmul.f32 %v493, %v509
        %v511 = vsub.f32 1.0, %v510
        %v512 = vmul.f32 %v509, %v511
        %v513 = vadd.f32 %v509, %v512
        %vm514 = vweird.f32 %v493
        %vm515 = vweird.f32 %v509
        %vm516 = vmor %vm514, %vm515
        %v517 = vsel %vm516, %v509, %v513
        %v518 = vand.u32 2147483647, %v493
        %vm519 = vcmp.eq.f32.partialorder %v518, 8.507059e+37
        %v520 = vand.u32 %v493, 2147483648
        %v521 = vor.u32 1.1754944e-38, %v520
        %v522 = vsel %vm519, %v521, %v517
        %v523 = vmul.f32 %v477, %v522
        %v524 = vrcp.pop %v494
        %v525 = vmul.f32 %v494, %v524
        %v526 = vsub.f32 1.0, %v525
        %v527 = vmul.f32 %v524, %v526
        %v528 = vadd.f32 %v524, %v527
        %vm529 = vweird.f32 %v494
        %vm530 = vweird.f32 %v524
        %vm531 = vmor %vm529, %vm530
        %v532 = vsel %vm531, %v524, %v528
        %v533 = vand.u32 2147483647, %v494
        %vm534 = vcmp.eq.f32.partialorder %v533, 8.507059e+37
        %v535 = vand.u32 %v494, 2147483648
        %v536 = vor.u32 1.1754944e-38, %v535
        %v537 = vsel %vm534, %v536, %v532
        %v538 = vmul.f32 %v478, %v537
        %v539 = vrcp.pop %v495
        %v540 = vmul.f32 %v495, %v539
        %v541 = vsub.f32 1.0, %v540
        %v542 = vmul.f32 %v539, %v541
        %v543 = vadd.f32 %v539, %v542
        %vm544 = vweird.f32 %v495
        %vm545 = vweird.f32 %v539
        %vm546 = vmor %vm544, %vm545
        %v547 = vsel %vm546, %v539, %v543
        %v548 = vand.u32 2147483647, %v495
        %vm549 = vcmp.eq.f32.partialorder %v548, 8.507059e+37
        %v550 = vand.u32 %v495, 2147483648
        %v551 = vor.u32 1.1754944e-38, %v550
        %v552 = vsel %vm549, %v551, %v547
        %v553 = vmul.f32 %v479, %v552
        %v554 = vrcp.pop %v496
        %v555 = vmul.f32 %v496, %v554
        %v556 = vsub.f32 1.0, %v555
        %v557 = vmul.f32 %v554, %v556
        %v558 = vadd.f32 %v554, %v557
        %vm559 = vweird.f32 %v496
        %vm560 = vweird.f32 %v554
        %vm561 = vmor %vm559, %vm560
        %v562 = vsel %vm561, %v554, %v558
        %v563 = vand.u32 2147483647, %v496
        %vm564 = vcmp.eq.f32.partialorder %v563, 8.507059e+37
        %v565 = vand.u32 %v496, 2147483648
        %v566 = vor.u32 1.1754944e-38, %v565
        %v567 = vsel %vm564, %v566, %v562
        %v568 = vmul.f32 %v480, %v567
        %v569 = vrcp.pop %v497
        %v570 = vmul.f32 %v497, %v569
        %v571 = vsub.f32 1.0, %v570
        %v572 = vmul.f32 %v569, %v571
        %v573 = vadd.f32 %v569, %v572
        %vm574 = vweird.f32 %v497
        %vm575 = vweird.f32 %v569
        %vm576 = vmor %vm574, %vm575
        %v577 = vsel %vm576, %v569, %v573
        %v578 = vand.u32 2147483647, %v497
        %vm579 = vcmp.eq.f32.partialorder %v578, 8.507059e+37
        %v580 = vand.u32 %v497, 2147483648
        %v581 = vor.u32 1.1754944e-38, %v580
        %v582 = vsel %vm579, %v581, %v577
        %v583 = vmul.f32 %v481, %v582
        %v584 = vrcp.pop %v498
        %v585 = vmul.f32 %v498, %v584
        %v586 = vsub.f32 1.0, %v585
        %v587 = vmul.f32 %v584, %v586
        %v588 = vadd.f32 %v584, %v587
        %vm589 = vweird.f32 %v498
        %vm590 = vweird.f32 %v584
        %vm591 = vmor %vm589, %vm590
        %v592 = vsel %vm591, %v584, %v588
        %v593 = vand.u32 2147483647, %v498
        %vm594 = vcmp.eq.f32.partialorder %v593, 8.507059e+37
        %v595 = vand.u32 %v498, 2147483648
        %v596 = vor.u32 1.1754944e-38, %v595
        %v597 = vsel %vm594, %v596, %v592
        %v598 = vmul.f32 %v482, %v597
        %v599 = vrcp.pop %v499
        %v600 = vmul.f32 %v499, %v599
        %v601 = vsub.f32 1.0, %v600
        %v602 = vmul.f32 %v599, %v601
        %v603 = vadd.f32 %v599, %v602
        %vm604 = vweird.f32 %v499
        %vm605 = vweird.f32 %v599
        %vm606 = vmor %vm604, %vm605
        %v607 = vsel %vm606, %v599, %v603
        %v608 = vand.u32 2147483647, %v499
        %vm609 = vcmp.eq.f32.partialorder %v608, 8.507059e+37
        %v610 = vand.u32 %v499, 2147483648
        %v611 = vor.u32 1.1754944e-38, %v610
        %v612 = vsel %vm609, %v611, %v607
        %v613 = vmul.f32 %v483, %v612
        %v614 = vrcp.pop %v500
        %v615 = vmul.f32 %v500, %v614
        %v616 = vsub.f32 1.0, %v615
        %v617 = vmul.f32 %v614, %v616
        %v618 = vadd.f32 %v614, %v617
        %vm619 = vweird.f32 %v500
        %vm620 = vweird.f32 %v614
        %vm621 = vmor %vm619, %vm620
        %v622 = vsel %vm621, %v614, %v618
        %v623 = vand.u32 2147483647, %v500
        %vm624 = vcmp.eq.f32.partialorder %v623, 8.507059e+37
        %v625 = vand.u32 %v500, 2147483648
        %v626 = vor.u32 1.1754944e-38, %v625
        %v627 = vsel %vm624, %v626, %v622
        %v628 = vmul.f32 %v484, %v627
        %v629 = vrcp.pop %v501
        %v630 = vmul.f32 %v501, %v629
        %v631 = vsub.f32 1.0, %v630
        %v632 = vmul.f32 %v629, %v631
        %v633 = vadd.f32 %v629, %v632
        %vm634 = vweird.f32 %v501
        %vm635 = vweird.f32 %v629
        %vm636 = vmor %vm634, %vm635
        %v637 = vsel %vm636, %v629, %v633
        %v638 = vand.u32 2147483647, %v501
        %vm639 = vcmp.eq.f32.partialorder %v638, 8.507059e+37
        %v640 = vand.u32 %v501, 2147483648
        %v641 = vor.u32 1.1754944e-38, %v640
        %v642 = vsel %vm639, %v641, %v637
        %v643 = vmul.f32 %v485, %v642
        %v644 = vrcp.pop %v502
        %v645 = vmul.f32 %v502, %v644
        %v646 = vsub.f32 1.0, %v645
        %v647 = vmul.f32 %v644, %v646
        %v648 = vadd.f32 %v644, %v647
        %vm649 = vweird.f32 %v502
        %vm650 = vweird.f32 %v644
        %vm651 = vmor %vm649, %vm650
        %v652 = vsel %vm651, %v644, %v648
        %v653 = vand.u32 2147483647, %v502
        %vm654 = vcmp.eq.f32.partialorder %v653, 8.507059e+37
        %v655 = vand.u32 %v502, 2147483648
        %v656 = vor.u32 1.1754944e-38, %v655
        %v657 = vsel %vm654, %v656, %v652
        %v658 = vmul.f32 %v486, %v657
        %v659 = vrcp.pop %v503
        %v660 = vmul.f32 %v503, %v659
        %v661 = vsub.f32 1.0, %v660
        %v662 = vmul.f32 %v659, %v661
        %v663 = vadd.f32 %v659, %v662
        %vm664 = vweird.f32 %v503
        %vm665 = vweird.f32 %v659
        %vm666 = vmor %vm664, %vm665
        %v667 = vsel %vm666, %v659, %v663
        %v668 = vand.u32 2147483647, %v503
        %vm669 = vcmp.eq.f32.partialorder %v668, 8.507059e+37
        %v670 = vand.u32 %v503, 2147483648
        %v671 = vor.u32 1.1754944e-38, %v670
        %v672 = vsel %vm669, %v671, %v667
        %v673 = vmul.f32 %v487, %v672
        %v674 = vrcp.pop %v504
        %v675 = vmul.f32 %v504, %v674
        %v676 = vsub.f32 1.0, %v675
        %v677 = vmul.f32 %v674, %v676
        %v678 = vadd.f32 %v674, %v677
        %vm679 = vweird.f32 %v504
        %vm680 = vweird.f32 %v674
        %vm681 = vmor %vm679, %vm680
        %v682 = vsel %vm681, %v674, %v678
        %v683 = vand.u32 2147483647, %v504
        %vm684 = vcmp.eq.f32.partialorder %v683, 8.507059e+37
        %v685 = vand.u32 %v504, 2147483648
        %v686 = vor.u32 1.1754944e-38, %v685
        %v687 = vsel %vm684, %v686, %v682
        %v688 = vmul.f32 %v488, %v687
        %v689 = vrcp.pop %v505
        %v690 = vmul.f32 %v505, %v689
        %v691 = vsub.f32 1.0, %v690
        %v692 = vmul.f32 %v689, %v691
        %v693 = vadd.f32 %v689, %v692
        %vm694 = vweird.f32 %v505
        %vm695 = vweird.f32 %v689
        %vm696 = vmor %vm694, %vm695
        %v697 = vsel %vm696, %v689, %v693
        %v698 = vand.u32 2147483647, %v505
        %vm699 = vcmp.eq.f32.partialorder %v698, 8.507059e+37
        %v700 = vand.u32 %v505, 2147483648
        %v701 = vor.u32 1.1754944e-38, %v700
        %v702 = vsel %vm699, %v701, %v697
        %v703 = vmul.f32 %v489, %v702
        %v704 = vrcp.pop %v506
        %v705 = vmul.f32 %v506, %v704
        %v706 = vsub.f32 1.0, %v705
        %v707 = vmul.f32 %v704, %v706
        %v708 = vadd.f32 %v704, %v707
        %vm709 = vweird.f32 %v506
        %vm710 = vweird.f32 %v704
        %vm711 = vmor %vm709, %vm710
        %v712 = vsel %vm711, %v704, %v708
        %v713 = vand.u32 2147483647, %v506
        %vm714 = vcmp.eq.f32.partialorder %v713, 8.507059e+37
        %v715 = vand.u32 %v506, 2147483648
        %v716 = vor.u32 1.1754944e-38, %v715
        %v717 = vsel %vm714, %v716, %v712
        %v718 = vmul.f32 %v490, %v717
        %v719 = vrcp.pop %v507
        %v720 = vmul.f32 %v507, %v719
        %v721 = vsub.f32 1.0, %v720
        %v722 = vmul.f32 %v719, %v721
        %v723 = vadd.f32 %v719, %v722
        %vm724 = vweird.f32 %v507
        %vm725 = vweird.f32 %v719
        %vm726 = vmor %vm724, %vm725
        %v727 = vsel %vm726, %v719, %v723
        %v728 = vand.u32 2147483647, %v507
        %vm729 = vcmp.eq.f32.partialorder %v728, 8.507059e+37
        %v730 = vand.u32 %v507, 2147483648
        %v731 = vor.u32 1.1754944e-38, %v730
        %v732 = vsel %vm729, %v731, %v727
        %v733 = vmul.f32 %v491, %v732
        %v734 = vrcp.pop %v508
        %v735 = vmul.f32 %v508, %v734
        %v736 = vsub.f32 1.0, %v735
        %v737 = vmul.f32 %v734, %v736
        %v738 = vadd.f32 %v734, %v737
        %vm739 = vweird.f32 %v508
        %vm740 = vweird.f32 %v734
        %vm741 = vmor %vm739, %vm740
        %v742 = vsel %vm741, %v734, %v738
        %v743 = vand.u32 2147483647, %v508
        %vm744 = vcmp.eq.f32.partialorder %v743, 8.507059e+37
        %v745 = vand.u32 %v508, 2147483648
        %v746 = vor.u32 1.1754944e-38, %v745
        %v747 = vsel %vm744, %v746, %v742
        %v748 = vmul.f32 %v492, %v747
        %v749 = vmul.f32 %v374, %v523
        %v750 = vmul.f32 %v376, %v538
        %v751 = vmul.f32 %v379, %v553
        %v752 = vmul.f32 %v381, %v568
        %v753 = vmul.f32 %v384, %v583
        %v754 = vmul.f32 %v386, %v598
        %v755 = vmul.f32 %v389, %v613
        %v756 = vmul.f32 %v391, %v628
        %v757 = vmul.f32 %v394, %v643
        %v758 = vmul.f32 %v396, %v658
        %v759 = vmul.f32 %v399, %v673
        %v760 = vmul.f32 %v401, %v688
        %v761 = vmul.f32 %v404, %v703
        %v762 = vmul.f32 %v406, %v718
        %v763 = vmul.f32 %v409, %v733
        %v764 = vmul.f32 %v411, %v748
        %v765 = vld [vmem:[#allocation8 + $0x1] sm:$0x1]
        %766 = vadd.xlane.f32.xlu0 %v749
        %v767 = vpop.xlane.xlu0 %766
        %768 = vadd.xlane.f32.xlu0 %v750
        %v769 = vpop.xlane.xlu0 %768
        %770 = vadd.xlane.f32.xlu0 %v751
        %v771 = vpop.xlane.xlu0 %770
        %772 = vadd.xlane.f32.xlu0 %v752
        %v773 = vpop.xlane.xlu0 %772
        %774 = vadd.xlane.f32.xlu0 %v753
        %v775 = vpop.xlane.xlu0 %774
        %776 = vadd.xlane.f32.xlu0 %v754
        %v777 = vpop.xlane.xlu0 %776
        %778 = vadd.xlane.f32.xlu0 %v755
        %v779 = vpop.xlane.xlu0 %778
        %780 = vadd.xlane.f32.xlu0 %v756
        %v781 = vpop.xlane.xlu0 %780
        %782 = vadd.xlane.f32.xlu0 %v757
        %v783 = vpop.xlane.xlu0 %782
        %784 = vadd.xlane.f32.xlu0 %v758
        %v785 = vpop.xlane.xlu0 %784
        %786 = vadd.xlane.f32.xlu0 %v759
        %v787 = vpop.xlane.xlu0 %786
        %788 = vadd.xlane.f32.xlu0 %v760
        %v789 = vpop.xlane.xlu0 %788
        %790 = vadd.xlane.f32.xlu0 %v761
        %v791 = vpop.xlane.xlu0 %790
        %792 = vadd.xlane.f32.xlu0 %v762
        %v793 = vpop.xlane.xlu0 %792
        %794 = vadd.xlane.f32.xlu0 %v763
        %v795 = vpop.xlane.xlu0 %794
        %796 = vadd.xlane.f32.xlu0 %v764
        %v797 = vpop.xlane.xlu0 %796
        %v798 = vmul.f32 %v749, %v749
        %v799 = vmul.f32 %v750, %v750
        %v800 = vmul.f32 %v751, %v751
        %v801 = vmul.f32 %v752, %v752
        %v802 = vmul.f32 %v753, %v753
        %v803 = vmul.f32 %v754, %v754
        %v804 = vmul.f32 %v755, %v755
        %v805 = vmul.f32 %v756, %v756
        %v806 = vmul.f32 %v757, %v757
        %v807 = vmul.f32 %v758, %v758
        %v808 = vmul.f32 %v759, %v759
        %v809 = vmul.f32 %v760, %v760
        %v810 = vmul.f32 %v761, %v761
        %v811 = vmul.f32 %v762, %v762
        %v812 = vmul.f32 %v763, %v763
        %v813 = vmul.f32 %v764, %v764
        %814 = vadd.xlane.f32.xlu0 %v798
        %v815 = vpop.xlane.xlu0 %814
        %816 = vadd.xlane.f32.xlu0 %v799
        %v817 = vpop.xlane.xlu0 %816
        %818 = vadd.xlane.f32.xlu0 %v800
        %v819 = vpop.xlane.xlu0 %818
        %820 = vadd.xlane.f32.xlu0 %v801
        %v821 = vpop.xlane.xlu0 %820
        %822 = vadd.xlane.f32.xlu0 %v802
        %v823 = vpop.xlane.xlu0 %822
        %824 = vadd.xlane.f32.xlu0 %v803
        %v825 = vpop.xlane.xlu0 %824
        %826 = vadd.xlane.f32.xlu0 %v804
        %v827 = vpop.xlane.xlu0 %826
        %828 = vadd.xlane.f32.xlu0 %v805
        %v829 = vpop.xlane.xlu0 %828
        %830 = vadd.xlane.f32.xlu0 %v806
        %v831 = vpop.xlane.xlu0 %830
        %832 = vadd.xlane.f32.xlu0 %v807
        %v833 = vpop.xlane.xlu0 %832
        %834 = vadd.xlane.f32.xlu0 %v808
        %v835 = vpop.xlane.xlu0 %834
        %836 = vadd.xlane.f32.xlu0 %v809
        %v837 = vpop.xlane.xlu0 %836
        %838 = vadd.xlane.f32.xlu0 %v810
        %v839 = vpop.xlane.xlu0 %838
        %840 = vadd.xlane.f32.xlu0 %v811
        %v841 = vpop.xlane.xlu0 %840
        %842 = vadd.xlane.f32.xlu0 %v812
        %v843 = vpop.xlane.xlu0 %842
        %844 = vadd.xlane.f32.xlu0 %v813
        %v845 = vpop.xlane.xlu0 %844
        %v846 = vperm.slane %v765, 0
        %v847 = vmul.f32 %v749, %v846
        %v848 = vmul.f32 %v750, %v846
        %v849 = vmul.f32 %v751, %v846
        %v850 = vmul.f32 %v752, %v846
        %v851 = vmul.f32 %v753, %v846
        %v852 = vmul.f32 %v754, %v846
        %v853 = vmul.f32 %v755, %v846
        %v854 = vmul.f32 %v756, %v846
        %v855 = vmul.f32 %v757, %v846
        %v856 = vmul.f32 %v758, %v846
        %v857 = vmul.f32 %v759, %v846
        %v858 = vmul.f32 %v760, %v846
        %v859 = vmul.f32 %v761, %v846
        %v860 = vmul.f32 %v762, %v846
        %v861 = vmul.f32 %v763, %v846
        %v862 = vmul.f32 %v764, %v846
        %863 = vadd.xlane.f32.xlu0 %v847
        %v864 = vpop.xlane.xlu0 %863
        %865 = vadd.xlane.f32.xlu0 %v848
        %v866 = vpop.xlane.xlu0 %865
        %867 = vadd.xlane.f32.xlu0 %v849
        %v868 = vpop.xlane.xlu0 %867
        %869 = vadd.xlane.f32.xlu0 %v850
        %v870 = vpop.xlane.xlu0 %869
        %871 = vadd.xlane.f32.xlu0 %v851
        %v872 = vpop.xlane.xlu0 %871
        %873 = vadd.xlane.f32.xlu0 %v852
        %v874 = vpop.xlane.xlu0 %873
        %875 = vadd.xlane.f32.xlu0 %v853
        %v876 = vpop.xlane.xlu0 %875
        %877 = vadd.xlane.f32.xlu0 %v854
        %v878 = vpop.xlane.xlu0 %877
        %879 = vadd.xlane.f32.xlu0 %v855
        %v880 = vpop.xlane.xlu0 %879
        %881 = vadd.xlane.f32.xlu0 %v856
        %v882 = vpop.xlane.xlu0 %881
        %883 = vadd.xlane.f32.xlu0 %v857
        %v884 = vpop.xlane.xlu0 %883
        %885 = vadd.xlane.f32.xlu0 %v858
        %v886 = vpop.xlane.xlu0 %885
        %887 = vadd.xlane.f32.xlu0 %v859
        %v888 = vpop.xlane.xlu0 %887
        %889 = vadd.xlane.f32.xlu0 %v860
        %v890 = vpop.xlane.xlu0 %889
        %891 = vadd.xlane.f32.xlu0 %v861
        %v892 = vpop.xlane.xlu0 %891
        %893 = vadd.xlane.f32.xlu0 %v862
        %v894 = vpop.xlane.xlu0 %893
        %v895 = vmul.f32 %v767, 0.0078125
        %v896 = vmul.f32 %v769, 0.0078125
        %v897 = vmul.f32 %v771, 0.0078125
        %v898 = vmul.f32 %v773, 0.0078125
        %v899 = vmul.f32 %v775, 0.0078125
        %v900 = vmul.f32 %v777, 0.0078125
        %v901 = vmul.f32 %v779, 0.0078125
        %v902 = vmul.f32 %v781, 0.0078125
        %v903 = vmul.f32 %v783, 0.0078125
        %v904 = vmul.f32 %v785, 0.0078125
        %v905 = vmul.f32 %v787, 0.0078125
        %v906 = vmul.f32 %v789, 0.0078125
        %v907 = vmul.f32 %v791, 0.0078125
        %v908 = vmul.f32 %v793, 0.0078125
        %v909 = vmul.f32 %v795, 0.0078125
        %v910 = vmul.f32 %v797, 0.0078125
        %v911 = vmul.f32 %v815, 0.0078125
        %v912 = vmul.f32 %v817, 0.0078125
        %v913 = vmul.f32 %v819, 0.0078125
        %v914 = vmul.f32 %v821, 0.0078125
        %v915 = vmul.f32 %v823, 0.0078125
        %v916 = vmul.f32 %v825, 0.0078125
        %v917 = vmul.f32 %v827, 0.0078125
        %v918 = vmul.f32 %v829, 0.0078125
        %v919 = vmul.f32 %v831, 0.0078125
        %v920 = vmul.f32 %v833, 0.0078125
        %v921 = vmul.f32 %v835, 0.0078125
        %v922 = vmul.f32 %v837, 0.0078125
        %v923 = vmul.f32 %v839, 0.0078125
        %v924 = vmul.f32 %v841, 0.0078125
        %v925 = vmul.f32 %v843, 0.0078125
        %v926 = vmul.f32 %v845, 0.0078125
        %v927 = vmul.f32 %v895, %v895
        %v928 = vmul.f32 %v896, %v896
        %v929 = vmul.f32 %v897, %v897
        %v930 = vmul.f32 %v898, %v898
        %v931 = vmul.f32 %v899, %v899
        %v932 = vmul.f32 %v900, %v900
        %v933 = vmul.f32 %v901, %v901
        %v934 = vmul.f32 %v902, %v902
        %v935 = vmul.f32 %v903, %v903
        %v936 = vmul.f32 %v904, %v904
        %v937 = vmul.f32 %v905, %v905
        %v938 = vmul.f32 %v906, %v906
        %v939 = vmul.f32 %v907, %v907
        %v940 = vmul.f32 %v908, %v908
        %v941 = vmul.f32 %v909, %v909
        %v942 = vmul.f32 %v910, %v910
        %v943 = vsub.f32 %v911, %v927
        %v944 = vsub.f32 %v912, %v928
        %v945 = vsub.f32 %v913, %v929
        %v946 = vsub.f32 %v914, %v930
        %v947 = vsub.f32 %v915, %v931
        %v948 = vsub.f32 %v916, %v932
        %v949 = vsub.f32 %v917, %v933
        %v950 = vsub.f32 %v918, %v934
        %v951 = vsub.f32 %v919, %v935
        %v952 = vsub.f32 %v920, %v936
        %v953 = vsub.f32 %v921, %v937
        %v954 = vsub.f32 %v922, %v938
        %v955 = vsub.f32 %v923, %v939
        %v956 = vsub.f32 %v924, %v940
        %v957 = vsub.f32 %v925, %v941
        %v958 = vsub.f32 %v926, %v942
        %v959 = vmax.f32 %v943, 0.0
        %v960 = vmax.f32 %v944, 0.0
        %v961 = vmax.f32 %v945, 0.0
        %v962 = vmax.f32 %v946, 0.0
        %v963 = vmax.f32 %v947, 0.0
        %v964 = vmax.f32 %v948, 0.0
        %v965 = vmax.f32 %v949, 0.0
        %v966 = vmax.f32 %v950, 0.0
        %v967 = vmax.f32 %v951, 0.0
        %v968 = vmax.f32 %v952, 0.0
        %v969 = vmax.f32 %v953, 0.0
        %v970 = vmax.f32 %v954, 0.0
        %v971 = vmax.f32 %v955, 0.0
        %v972 = vmax.f32 %v956, 0.0
        %v973 = vmax.f32 %v957, 0.0
        %v974 = vmax.f32 %v958, 0.0
        %v975 = vadd.f32 %v959, 1e-05
        %v976 = vadd.f32 %v960, 1e-05
        %v977 = vadd.f32 %v961, 1e-05
        %v978 = vadd.f32 %v962, 1e-05
        %v979 = vadd.f32 %v963, 1e-05
        %v980 = vadd.f32 %v964, 1e-05
        %v981 = vadd.f32 %v965, 1e-05
        %v982 = vadd.f32 %v966, 1e-05
        %v983 = vadd.f32 %v967, 1e-05
        %v984 = vadd.f32 %v968, 1e-05
        %v985 = vadd.f32 %v969, 1e-05
        %v986 = vadd.f32 %v970, 1e-05
        %v987 = vadd.f32 %v971, 1e-05
        %v988 = vadd.f32 %v972, 1e-05
        %v989 = vadd.f32 %v973, 1e-05
        %v990 = vadd.f32 %v974, 1e-05
        %v991 = vrsqrt.pop %v975
        %v992 = vmul.f32 %v991, %v975
        %v993 = vmul.f32 %v992, %v991
        %v994 = vmul.f32 0.5, %v993
        %v995 = vsub.f32 1.5, %v994
        %v996 = vmul.f32 %v991, %v995
        %vm997 = vweird.f32 %v975
        %vm998 = vweird.f32 %v991
        %vm999 = vmor %vm997, %vm998
        %v1000 = vsel %vm999, %v991, %v996
        %v1001 = vrsqrt.pop %v976
        %v1002 = vmul.f32 %v1001, %v976
        %v1003 = vmul.f32 %v1002, %v1001
        %v1004 = vmul.f32 0.5, %v1003
        %v1005 = vsub.f32 1.5, %v1004
        %v1006 = vmul.f32 %v1001, %v1005
        %vm1007 = vweird.f32 %v976
        %vm1008 = vweird.f32 %v1001
        %vm1009 = vmor %vm1007, %vm1008
        %v1010 = vsel %vm1009, %v1001, %v1006
        %v1011 = vrsqrt.pop %v977
        %v1012 = vmul.f32 %v1011, %v977
        %v1013 = vmul.f32 %v1012, %v1011
        %v1014 = vmul.f32 0.5, %v1013
        %v1015 = vsub.f32 1.5, %v1014
        %v1016 = vmul.f32 %v1011, %v1015
        %vm1017 = vweird.f32 %v977
        %vm1018 = vweird.f32 %v1011
        %vm1019 = vmor %vm1017, %vm1018
        %v1020 = vsel %vm1019, %v1011, %v1016
        %v1021 = vrsqrt.pop %v978
        %v1022 = vmul.f32 %v1021, %v978
        %v1023 = vmul.f32 %v1022, %v1021
        %v1024 = vmul.f32 0.5, %v1023
        %v1025 = vsub.f32 1.5, %v1024
        %v1026 = vmul.f32 %v1021, %v1025
        %vm1027 = vweird.f32 %v978
        %vm1028 = vweird.f32 %v1021
        %vm1029 = vmor %vm1027, %vm1028
        %v1030 = vsel %vm1029, %v1021, %v1026
        %v1031 = vrsqrt.pop %v979
        %v1032 = vmul.f32 %v1031, %v979
        %v1033 = vmul.f32 %v1032, %v1031
        %v1034 = vmul.f32 0.5, %v1033
        %v1035 = vsub.f32 1.5, %v1034
        %v1036 = vmul.f32 %v1031, %v1035
        %vm1037 = vweird.f32 %v979
        %vm1038 = vweird.f32 %v1031
        %vm1039 = vmor %vm1037, %vm1038
        %v1040 = vsel %vm1039, %v1031, %v1036
        %v1041 = vrsqrt.pop %v980
        %v1042 = vmul.f32 %v1041, %v980
        %v1043 = vmul.f32 %v1042, %v1041
        %v1044 = vmul.f32 0.5, %v1043
        %v1045 = vsub.f32 1.5, %v1044
        %v1046 = vmul.f32 %v1041, %v1045
        %vm1047 = vweird.f32 %v980
        %vm1048 = vweird.f32 %v1041
        %vm1049 = vmor %vm1047, %vm1048
        %v1050 = vsel %vm1049, %v1041, %v1046
        %v1051 = vrsqrt.pop %v981
        %v1052 = vmul.f32 %v1051, %v981
        %v1053 = vmul.f32 %v1052, %v1051
        %v1054 = vmul.f32 0.5, %v1053
        %v1055 = vsub.f32 1.5, %v1054
        %v1056 = vmul.f32 %v1051, %v1055
        %vm1057 = vweird.f32 %v981
        %vm1058 = vweird.f32 %v1051
        %vm1059 = vmor %vm1057, %vm1058
        %v1060 = vsel %vm1059, %v1051, %v1056
        %v1061 = vrsqrt.pop %v982
        %v1062 = vmul.f32 %v1061, %v982
        %v1063 = vmul.f32 %v1062, %v1061
        %v1064 = vmul.f32 0.5, %v1063
        %v1065 = vsub.f32 1.5, %v1064
        %v1066 = vmul.f32 %v1061, %v1065
        %vm1067 = vweird.f32 %v982
        %vm1068 = vweird.f32 %v1061
        %vm1069 = vmor %vm1067, %vm1068
        %v1070 = vsel %vm1069, %v1061, %v1066
        %v1071 = vrsqrt.pop %v983
        %v1072 = vmul.f32 %v1071, %v983
        %v1073 = vmul.f32 %v1072, %v1071
        %v1074 = vmul.f32 0.5, %v1073
        %v1075 = vsub.f32 1.5, %v1074
        %v1076 = vmul.f32 %v1071, %v1075
        %vm1077 = vweird.f32 %v983
        %vm1078 = vweird.f32 %v1071
        %vm1079 = vmor %vm1077, %vm1078
        %v1080 = vsel %vm1079, %v1071, %v1076
        %v1081 = vrsqrt.pop %v984
        %v1082 = vmul.f32 %v1081, %v984
        %v1083 = vmul.f32 %v1082, %v1081
        %v1084 = vmul.f32 0.5, %v1083
        %v1085 = vsub.f32 1.5, %v1084
        %v1086 = vmul.f32 %v1081, %v1085
        %vm1087 = vweird.f32 %v984
        %vm1088 = vweird.f32 %v1081
        %vm1089 = vmor %vm1087, %vm1088
        %v1090 = vsel %vm1089, %v1081, %v1086
        %v1091 = vrsqrt.pop %v985
        %v1092 = vmul.f32 %v1091, %v985
        %v1093 = vmul.f32 %v1092, %v1091
        %v1094 = vmul.f32 0.5, %v1093
        %v1095 = vsub.f32 1.5, %v1094
        %v1096 = vmul.f32 %v1091, %v1095
        %vm1097 = vweird.f32 %v985
        %vm1098 = vweird.f32 %v1091
        %vm1099 = vmor %vm1097, %vm1098
        %v1100 = vsel %vm1099, %v1091, %v1096
        %v1101 = vrsqrt.pop %v986
        %v1102 = vmul.f32 %v1101, %v986
        %v1103 = vmul.f32 %v1102, %v1101
        %v1104 = vmul.f32 0.5, %v1103
        %v1105 = vsub.f32 1.5, %v1104
        %v1106 = vmul.f32 %v1101, %v1105
        %vm1107 = vweird.f32 %v986
        %vm1108 = vweird.f32 %v1101
        %vm1109 = vmor %vm1107, %vm1108
        %v1110 = vsel %vm1109, %v1101, %v1106
        %v1111 = vrsqrt.pop %v987
        %v1112 = vmul.f32 %v1111, %v987
        %v1113 = vmul.f32 %v1112, %v1111
        %v1114 = vmul.f32 0.5, %v1113
        %v1115 = vsub.f32 1.5, %v1114
        %v1116 = vmul.f32 %v1111, %v1115
        %vm1117 = vweird.f32 %v987
        %vm1118 = vweird.f32 %v1111
        %vm1119 = vmor %vm1117, %vm1118
        %v1120 = vsel %vm1119, %v1111, %v1116
        %v1121 = vrsqrt.pop %v988
        %v1122 = vmul.f32 %v1121, %v988
        %v1123 = vmul.f32 %v1122, %v1121
        %v1124 = vmul.f32 0.5, %v1123
        %v1125 = vsub.f32 1.5, %v1124
        %v1126 = vmul.f32 %v1121, %v1125
        %vm1127 = vweird.f32 %v988
        %vm1128 = vweird.f32 %v1121
        %vm1129 = vmor %vm1127, %vm1128
        %v1130 = vsel %vm1129, %v1121, %v1126
        %v1131 = vrsqrt.pop %v989
        %v1132 = vmul.f32 %v1131, %v989
        %v1133 = vmul.f32 %v1132, %v1131
        %v1134 = vmul.f32 0.5, %v1133
        %v1135 = vsub.f32 1.5, %v1134
        %v1136 = vmul.f32 %v1131, %v1135
        %vm1137 = vweird.f32 %v989
        %vm1138 = vweird.f32 %v1131
        %vm1139 = vmor %vm1137, %vm1138
        %v1140 = vsel %vm1139, %v1131, %v1136
        %v1141 = vrsqrt.pop %v990
        %v1142 = vmul.f32 %v1141, %v990
        %v1143 = vmul.f32 %v1142, %v1141
        %v1144 = vmul.f32 0.5, %v1143
        %v1145 = vsub.f32 1.5, %v1144
        %v1146 = vmul.f32 %v1141, %v1145
        %vm1147 = vweird.f32 %v990
        %vm1148 = vweird.f32 %v1141
        %vm1149 = vmor %vm1147, %vm1148
        %v1150 = vsel %vm1149, %v1141, %v1146
        %s1151 = sld [smem:[#allocation9]]
        %v1152 = vstv %s1151
        %v1153 = vmul.f32 %v895, %v1152
        %v1154 = vmul.f32 %v896, %v1152
        %v1155 = vmul.f32 %v897, %v1152
        %v1156 = vmul.f32 %v898, %v1152
        %v1157 = vmul.f32 %v899, %v1152
        %v1158 = vmul.f32 %v900, %v1152
        %v1159 = vmul.f32 %v901, %v1152
        %v1160 = vmul.f32 %v902, %v1152
        %v1161 = vmul.f32 %v903, %v1152
        %v1162 = vmul.f32 %v904, %v1152
        %v1163 = vmul.f32 %v905, %v1152
        %v1164 = vmul.f32 %v906, %v1152
        %v1165 = vmul.f32 %v907, %v1152
        %v1166 = vmul.f32 %v908, %v1152
        %v1167 = vmul.f32 %v909, %v1152
        %v1168 = vmul.f32 %v910, %v1152
        %v1169 = vsub.f32 %v864, %v1153
        %v1170 = vsub.f32 %v866, %v1154
        %v1171 = vsub.f32 %v868, %v1155
        %v1172 = vsub.f32 %v870, %v1156
        %v1173 = vsub.f32 %v872, %v1157
        %v1174 = vsub.f32 %v874, %v1158
        %v1175 = vsub.f32 %v876, %v1159
        %v1176 = vsub.f32 %v878, %v1160
        %v1177 = vsub.f32 %v880, %v1161
        %v1178 = vsub.f32 %v882, %v1162
        %v1179 = vsub.f32 %v884, %v1163
        %v1180 = vsub.f32 %v886, %v1164
        %v1181 = vsub.f32 %v888, %v1165
        %v1182 = vsub.f32 %v890, %v1166
        %v1183 = vsub.f32 %v892, %v1167
        %v1184 = vsub.f32 %v894, %v1168
        %v1185 = vmul.f32 %v1000, %v1169
        %v1186 = vmul.f32 %v1010, %v1170
        %v1187 = vmul.f32 %v1020, %v1171
        %v1188 = vmul.f32 %v1030, %v1172
        %v1189 = vmul.f32 %v1040, %v1173
        %v1190 = vmul.f32 %v1050, %v1174
        %v1191 = vmul.f32 %v1060, %v1175
        %v1192 = vmul.f32 %v1070, %v1176
        %v1193 = vmul.f32 %v1080, %v1177
        %v1194 = vmul.f32 %v1090, %v1178
        %v1195 = vmul.f32 %v1100, %v1179
        %v1196 = vmul.f32 %v1110, %v1180
        %v1197 = vmul.f32 %v1120, %v1181
        %v1198 = vmul.f32 %v1130, %v1182
        %v1199 = vmul.f32 %v1140, %v1183
        %v1200 = vmul.f32 %v1150, %v1184
        %s1201 = sld [smem:[#allocation9 + $0x1]]
        %v1202 = vstv %s1201
        %v1203 = vadd.f32 %v1185, %v1202
        %v1204 = vadd.f32 %v1186, %v1202
        %v1205 = vadd.f32 %v1187, %v1202
        %v1206 = vadd.f32 %v1188, %v1202
        %v1207 = vadd.f32 %v1189, %v1202
        %v1208 = vadd.f32 %v1190, %v1202
        %v1209 = vadd.f32 %v1191, %v1202
        %v1210 = vadd.f32 %v1192, %v1202
        %v1211 = vadd.f32 %v1193, %v1202
        %v1212 = vadd.f32 %v1194, %v1202
        %v1213 = vadd.f32 %v1195, %v1202
        %v1214 = vadd.f32 %v1196, %v1202
        %v1215 = vadd.f32 %v1197, %v1202
        %v1216 = vadd.f32 %v1198, %v1202
        %v1217 = vadd.f32 %v1199, %v1202
        %v1218 = vadd.f32 %v1200, %v1202
        %1219 = vxpose.xlu0.b32.start [1/16] %v1203, 128
        %1220 = vxpose.xlu0.b32.cont [2/16] %v1204, 128
        %1221 = vxpose.xlu0.b32.cont [3/16] %v1205, 128
        %1222 = vxpose.xlu0.b32.cont [4/16] %v1206, 128
        %1223 = vxpose.xlu0.b32.cont [5/16] %v1207, 128
        %1224 = vxpose.xlu0.b32.cont [6/16] %v1208, 128
        %1225 = vxpose.xlu0.b32.cont [7/16] %v1209, 128
        %1226 = vxpose.xlu0.b32.cont [8/16] %v1210, 128
        %1227 = vxpose.xlu0.b32.cont [9/16] %v1211, 128
        %1228 = vxpose.xlu0.b32.cont [10/16] %v1212, 128
        %1229 = vxpose.xlu0.b32.cont [11/16] %v1213, 128
        %1230 = vxpose.xlu0.b32.cont [12/16] %v1214, 128
        %1231 = vxpose.xlu0.b32.cont [13/16] %v1215, 128
        %1232 = vxpose.xlu0.b32.cont [14/16] %v1216, 128
        %1233 = vxpose.xlu0.b32.cont [15/16] %v1217, 128
        %1234 = vxpose.xlu0.b32.end [16/16] %v1218, 128
        %v1235 = vpop.trf.xlu0
        %v1236 = vpop.trf.xlu0
        %v1237 = vpop.trf.xlu0
        %v1238 = vpop.trf.xlu0
        %v1239 = vpop.trf.xlu0
        %v1240 = vpop.trf.xlu0
        %v1241 = vpop.trf.xlu0
        %v1242 = vpop.trf.xlu0
        %v1243 = vpop.trf.xlu0
        %v1244 = vpop.trf.xlu0
        %v1245 = vpop.trf.xlu0
        %v1246 = vpop.trf.xlu0
        %v1247 = vpop.trf.xlu0
        %v1248 = vpop.trf.xlu0
        %v1249 = vpop.trf.xlu0
        %v1250 = vpop.trf.xlu0
        %1251 = vst [vmem:[%s268] sm:$0x1] %v1235
        %s1252 = sand.u32 %s120, 1
        %s1253 = scalar_lea.sflag [#allocation4], %s1252
        %s1254 = sand.u32 %s120, 1
        %s1255 = scalar_lea.vmem [#allocation10], %s1254
        // Predicated region
        $region53: #{tpu_custom_call.1} parent=35 // pred_check
          %p1256 = pneg %p130
        $region54: #{tpu_custom_call.1} parent=35 // pred_check_branch
          %1258 = sbr.rel (%p1256) target = $region56
        $region55: #{tpu_custom_call.1} parent=35 // pred_region
          %1260 = vsyncadd %s1253, 0
          %s1261 = scalar_lea.hbm %s4, %s23
          %s1263 = sshll.u32 %s1255, 4
          %s1264 = int_to_ptr.vmem [resolvable:$true] %s1263
          %s1265 = sshll.u32 %s1261, 4
          %s1266 = int_to_ptr.hbm [resolvable:$true] %s1265
          %1268 = dma.vmem_to_hbm [thread:$0]  %s1264, 16, %s1266, %s1253
        $region56: #{tpu_custom_call.1} parent=35 // pred_fallthru
          _
      $region36: #{tpu_custom_call.1} parent=5 // pred_fallthru
        _
      %p1269 = scmp.le.s32.totalorder 2, %s18
      // Predicated region
      $region57: #{tpu_custom_call.1} parent=5 // pred_check
        %p1270 = pneg %p1269
      $region58: #{tpu_custom_call.1} parent=5 // pred_check_branch
        %1272 = sbr.rel (%p1270) target = $region60
      $region59: #{tpu_custom_call.1} parent=5 // pred_region
        %s1273 = ssub.s32 %s18, 2
        // Predicated region
        $region61: #{tpu_custom_call.1} parent=59 // pred_check
          %p1274 = pneg %p136
        $region62: #{tpu_custom_call.1} parent=59 // pred_check_branch
          %1276 = sbr.rel (%p1274) target = $region64
        $region63: #{tpu_custom_call.1} parent=59 // pred_region
          %s1277 = sand.u32 %s121, 1
          %s1278 = scalar_lea.sflag [#allocation4], %s1277
          %s1279 = sand.u32 %s121, 1
          %s1280 = scalar_lea.vmem [#allocation10], %s1279
          %1282 = dma.done %s1278, 16
        $region64: #{tpu_custom_call.1} parent=59 // pred_fallthru
          _
      $region60: #{tpu_custom_call.1} parent=5 // pred_fallthru
        _
    $region6: #{tpu_custom_call.1} parent=1 // loop_footer
      %s22 = sadd.s32 1, %s18
    $region7: #{tpu_custom_call.1} parent=1 // loop_footer_branch
      %17 = sbr.rel target = $region3
    $region8: #{tpu_custom_call.1} parent=1 // loop_exit
      _
    %1283 = vsyncpa [#allocation3], 1
    %s1284 = scalar_lea.sflag [#allocation3], 1
    %1285 = vsyncpa %s1284, 1
    %1286 = vsyncpa [#allocation7], 1
    %1287 = vsyncpa [#allocation4], 1
    %s1288 = scalar_lea.sflag [#allocation4], 1
    %1289 = vsyncpa %s1288, 1
    %1290 = vsyncpa [#allocation5], 1
    %s1291 = scalar_lea.sflag [#allocation5], 1
    %1292 = vsyncpa %s1291, 1

</llo_original>
